<compile_context>
chip_gen: v7x
topology: tpu7x:2x2x1
jax: 0.10.0
libtpu: 0.0.40
codegen_flags: <defaults>
</compile_context>

<pallas_src>
import functools
import math

import jax
import jax.numpy as jnp
from jax import lax
from jax.experimental import pallas as pl
from jax.experimental.pallas import tpu as pltpu


def _kernel_nostate(x_ref, w_ref, p_ref, o_ref):
    """prev_state=None, residual=None fast path.

    x_ref : (KKCp, Mb)   transposed im2col block (lanes = pixels)
    w_ref : (Cout, KKCp) fused conv weights
    p_ref : (Cout, 4)    [sigmoid(leak_v), sigmoid(leak_t), clamp(t0), clamp(t1)]
    o_ref : (4*Cout, Mb) rows = [out | v_out | z_out | t_out]
    """
    C = p_ref.shape[0]
    ff = jnp.dot(w_ref[...], x_ref[...], preferred_element_type=jnp.float32)  # (Cout, Mb)
    leak_v = p_ref[:, 0:1]
    t0 = p_ref[:, 2:3]
    # v = z = t = 0  ->  t_out = 0, thresh = t0, no reset term.
    v_out = (1.0 - leak_v) * ff
    z_out = (v_out > t0).astype(jnp.float32)
    o_ref[0 * C:1 * C, :] = z_out
    o_ref[1 * C:2 * C, :] = v_out
    o_ref[2 * C:3 * C, :] = z_out
    o_ref[3 * C:4 * C, :] = jnp.zeros_like(v_out)


def _kernel_res(x_ref, w_ref, p_ref, r_ref, o_ref):
    """prev_state=None but residual present.  r_ref: (Cout, Mb)."""
    C = p_ref.shape[0]
    ff = jnp.dot(w_ref[...], x_ref[...], preferred_element_type=jnp.float32)
    leak_v = p_ref[:, 0:1]
    t0 = p_ref[:, 2:3]
    v_out = (1.0 - leak_v) * ff
    z_out = (v_out > t0).astype(jnp.float32)
    o_ref[0 * C:1 * C, :] = z_out + r_ref[...]
    o_ref[1 * C:2 * C, :] = v_out
    o_ref[2 * C:3 * C, :] = z_out
    o_ref[3 * C:4 * C, :] = jnp.zeros_like(v_out)


def _kernel_state(x_ref, w_ref, p_ref, s_ref, o_ref, *, has_residual):
    """General path. s_ref rows = [v | z | t] (+ [res] iff has_residual), Cout rows each."""
    C = p_ref.shape[0]
    ff = jnp.dot(w_ref[...], x_ref[...], preferred_element_type=jnp.float32)  # (Cout, Mb)
    leak_v = p_ref[:, 0:1]
    leak_t = p_ref[:, 1:2]
    t0 = p_ref[:, 2:3]
    t1 = p_ref[:, 3:4]
    v = s_ref[0 * C:1 * C, :]
    z = s_ref[1 * C:2 * C, :]
    t = s_ref[2 * C:3 * C, :]

    # Store each result as soon as it is produced to keep vreg live ranges short.
    t_out = t * leak_t + (1.0 - leak_t) * z                 # adaptive threshold state
    o_ref[3 * C:4 * C, :] = t_out
    # soft reset (hard_reset=False); detach only matters for backward.
    v_out = v * leak_v + (1.0 - leak_v) * ff - z * (t0 + t1 * t)
    o_ref[1 * C:2 * C, :] = v_out
    thresh = t0 + t1 * t_out
    z_out = (v_out > thresh).astype(jnp.float32)            # arctanspike forward = Heaviside
    o_ref[2 * C:3 * C, :] = z_out
    if has_residual:
        o_ref[0 * C:1 * C, :] = z_out + s_ref[3 * C:4 * C, :]
    else:
        o_ref[0 * C:1 * C, :] = z_out


def _round_up(a, b):
    return ((a + b - 1) // b) * b


def conv_alif_forward(x_nchw, weight_oihw, leak_v, leak_t, t0, t1,
                      prev_state=None, residual=None):
    """ConvALIF forward. Returns (z_out + residual, stacked_state) in NCHW, like PyTorch."""
    if isinstance(residual, (int, float)) and residual == 0:
        residual = None

    N, Cin, H, W = x_nchw.shape
    Cout, _, K, _ = weight_oihw.shape
    pad = K // 2
    M = N * H * W
    KKC = K * K * Cin
    KKCp = _round_up(KKC, 8)                       # contraction dim on sublanes

    # --- transposed im2col slab: rows = (kh, kw, cin) taps, cols = (n, h, w) pixels ---
    x = jnp.transpose(x_nchw, (0, 2, 3, 1)).astype(jnp.float32)          # NHWC
    x_pad = jnp.pad(x, ((0, 0), (pad, pad), (pad, pad), (0, 0)))
    taps = jnp.stack([x_pad[:, kh:kh + H, kw:kw + W, :]
                      for kh in range(K) for kw in range(K)])            # (K*K, N, H, W, Cin)
    x2d = jnp.transpose(taps, (0, 4, 1, 2, 3)).reshape(KKC, M)

    # OIHW -> (Cout, K*K*Cin), column ordering matched to the im2col rows.
    w2d = jnp.transpose(weight_oihw, (0, 2, 3, 1)).reshape(Cout, KKC).astype(jnp.float32)

    if KKCp != KKC:
        x2d = jnp.pad(x2d, ((0, KKCp - KKC), (0, 0)))
        w2d = jnp.pad(w2d, ((0, 0), (0, KKCp - KKC)))

    # Per-channel params, transformed once here (sigmoid / clamps).
    params = jnp.stack([
        jax.nn.sigmoid(leak_v.reshape(-1)),
        jax.nn.sigmoid(leak_t.reshape(-1)),
        jnp.maximum(t0.reshape(-1), 0.01),
        jnp.maximum(t1.reshape(-1), 0.0),
    ], axis=1).astype(jnp.float32)                                       # (Cout, 4)

    # --- fused state/residual slab (only the parts that exist): rows = [v | z | t | res] ---
    s_parts = []
    if prev_state is not None:                    # PyTorch layout (3, N, Cout, H, W)
        vzt = jnp.transpose(prev_state.astype(jnp.float32), (0, 2, 1, 3, 4))
        s_parts.append(vzt.reshape(3 * Cout, M))
    if residual is not None:                      # (N, Cout, H, W)
        res = jnp.transpose(residual.astype(jnp.float32), (1, 0, 2, 3)).reshape(Cout, M)
        s_parts.append(res)
    n_srows = sum(p.shape[0] for p in s_parts)

    # --- pixel tiling: lane-dim blocks of Mb (multiple of 128), sized from a VMEM budget
    # so 2x double-buffered blocks stay well under v7x's 32 MiB default scoped VMEM. ---
    bytes_per_col = 4 * (KKCp + n_srows + 4 * Cout)
    budget = 12 * 1024 * 1024
    Mb = max(128, (budget // (2 * bytes_per_col)) // 128 * 128)
    Mb = min(Mb, 8192, _round_up(M, 128))
    Mp = _round_up(M, Mb)
    grid = (Mp // Mb,)

    def pad_cols(a):
        return jnp.pad(a, ((0, 0), (0, Mp - M))) if Mp != M else a

    col_spec = lambda rows: pl.BlockSpec((rows, Mb), lambda i: (0, i))
    full_spec = lambda shape: pl.BlockSpec(shape, lambda i: (0, 0))

    in_specs = [col_spec(KKCp), full_spec((Cout, KKCp)), full_spec((Cout, 4))]
    args = [pad_cols(x2d), w2d, params]

    if prev_state is None and residual is None:
        kernel = _kernel_nostate
    elif prev_state is None:
        kernel = _kernel_res
        in_specs.append(col_spec(Cout))
        args.append(pad_cols(s_parts[0]))
    else:
        kernel = functools.partial(_kernel_state, has_residual=residual is not None)
        slab_in = s_parts[0] if len(s_parts) == 1 else jnp.concatenate(s_parts, axis=0)
        in_specs.append(col_spec(n_srows))
        args.append(pad_cols(slab_in))

    slab = pl.pallas_call(
        kernel,
        out_shape=jax.ShapeDtypeStruct((4 * Cout, Mp), jnp.float32),
        grid_spec=pltpu.PrefetchScalarGridSpec(
            num_scalar_prefetch=0, grid=grid,
            in_specs=in_specs,
            out_specs=col_spec(4 * Cout)),
        compiler_params=pltpu.CompilerParams(dimension_semantics=("parallel",)),
    )(*args)

    # (4*Cout, Mp) -> (4, N, Cout, H, W) with ONE fused transpose.
    full = slab[:, :M].reshape(4, Cout, N, H, W).transpose(0, 2, 1, 3, 4)
    return full[0], full[1:4]


def _reference(x_nchw, weight_oihw, leak_v, leak_t, t0, t1, prev_state=None, residual=0.0):
    """Pure-JAX reference reproducing the PyTorch module forward (also returns thresh)."""
    K = weight_oihw.shape[2]
    pad = K // 2
    ff = lax.conv_general_dilated(
        x_nchw.astype(jnp.float32), weight_oihw.astype(jnp.float32),
        window_strides=(1, 1), padding=((pad, pad), (pad, pad)),
        dimension_numbers=("NCHW", "OIHW", "NCHW"))
    if prev_state is None:
        prev_state = jnp.zeros((3,) + ff.shape, ff.dtype)
    v, z, t = prev_state
    t0c = jnp.maximum(t0, 0.01)
    t1c = jnp.maximum(t1, 0.0)
    lv = jax.nn.sigmoid(leak_v)
    lt = jax.nn.sigmoid(leak_t)
    t_out = t * lt + (1.0 - lt) * z
    thresh = t0c + t1c * t_out
    v_out = v * lv + (1.0 - lv) * ff - z * (t0c + t1c * t)
    z_out = (v_out > thresh).astype(ff.dtype)
    return z_out + residual, jnp.stack([v_out, z_out, t_out]), thresh


if __name__ == "__main__":
    # Small shapes consistent with the module: batch=2, in_ch=4, spatial=16x16, hidden=32, k=3.
    N, Cin, H, W = 2, 4, 16, 16
    Cout, K = 32, 3

    key = jax.random.PRNGKey(0)
    k_x, k_w, k_lv, k_lt, k_s, k_r = jax.random.split(key, 6)

    x = jax.random.normal(k_x, (N, Cin, H, W), jnp.float32)

    # Deterministic parameter init mirroring the module's __init__.
    w_scale = math.sqrt(1.0 / Cin)
    weight = jax.random.uniform(k_w, (Cout, Cin, K, K), jnp.float32,
                                minval=-w_scale, maxval=w_scale)
    leak_v = jax.random.normal(k_lv, (Cout, 1, 1), jnp.float32) * 0.1 + (-4.0)
    leak_t = jax.random.normal(k_lt, (Cout, 1, 1), jnp.float32) * 0.1 + (-4.0)
    t0 = jnp.full((Cout, 1, 1), 0.01, jnp.float32)   # std 0.0
    t1 = jnp.full((Cout, 1, 1), 1.8, jnp.float32)    # std 0.0

    def check(out, state, ref_out, ref_state, ref_thresh):
        v, z, tt = state
        rv, rz, rt = ref_state
        assert bool(jnp.allclose(v, rv, atol=1e-5, rtol=1e-5))
        assert bool(jnp.allclose(tt, rt, atol=1e-5, rtol=1e-5))
        # Spikes come from a hard comparison; only near-threshold elements may flip
        # due to matmul-vs-conv accumulation-order differences.
        near = jnp.abs(rv - ref_thresh) < 1e-4
        assert bool(jnp.all((z == rz) | near))
        assert bool(jnp.all(jnp.isclose(out, ref_out, atol=1e-5, rtol=1e-5) | near))

    # --- prev_state=None / residual=None fast path ---
    out, state = conv_alif_forward(x, weight, leak_v, leak_t, t0, t1)
    out, state = jax.block_until_ready((out, state))
    assert out.shape == (N, Cout, H, W)
    assert state.shape == (3, N, Cout, H, W)
    ref_out, ref_state, ref_th = _reference(x, weight, leak_v, leak_t, t0, t1)
    check(out, state, ref_out, ref_state, ref_th)

    # --- nonzero prev_state + residual (exercises reset & adaptive-threshold terms) ---
    prev_state = jax.random.normal(k_s, (3, N, Cout, H, W), jnp.float32)
    prev_state = prev_state.at[1].set((prev_state[1] > 0.0).astype(jnp.float32))  # binary spikes
    residual = jax.random.normal(k_r, (N, Cout, H, W), jnp.float32)
    out2, state2 = conv_alif_forward(x, weight, leak_v, leak_t, t0, t1, prev_state, residual)
    out2, state2 = jax.block_until_ready((out2, state2))
    ref_out2, ref_state2, ref_th2 = _reference(x, weight, leak_v, leak_t, t0, t1,
                                               prev_state, residual)
    check(out2, state2, ref_out2, ref_state2, ref_th2)

    # --- state-only and residual-only specializations ---
    out3, state3 = conv_alif_forward(x, weight, leak_v, leak_t, t0, t1, prev_state, None)
    out3, state3 = jax.block_until_ready((out3, state3))
    ref_out3, ref_state3, ref_th3 = _reference(x, weight, leak_v, leak_t, t0, t1, prev_state)
    check(out3, state3, ref_out3, ref_state3, ref_th3)

    out4, state4 = conv_alif_forward(x, weight, leak_v, leak_t, t0, t1, None, residual)
    out4, state4 = jax.block_until_ready((out4, state4))
    ref_out4, ref_state4, ref_th4 = _reference(x, weight, leak_v, leak_t, t0, t1, None, residual)
    check(out4, state4, ref_out4, ref_state4, ref_th4)

    print("KERNEL_OK")
</pallas_src>

<mosaic_0001>
module attributes {stable_mosaic.version = 11 : i64} {
  func.func @_kernel_nostate(%arg0: i32, %arg1: memref<40x512xf32, #tpu.memory_space<vmem>>, %arg2: memref<32x40xf32, #tpu.memory_space<vmem>>, %arg3: memref<32x4xf32, #tpu.memory_space<vmem>>, %arg4: memref<128x512xf32, #tpu.memory_space<vmem>>) attributes {dimension_semantics = [#tpu.dimension_semantics<parallel>], iteration_bounds = array<i64: 1>, scalar_prefetch = 0 : i64, scratch_operands = 0 : i64, tpu.core_type = #tpu.core_type<tc>, window_params = [{transform_indices = @transform_0, window_bounds = array<i64: 40, 512>}, {pipeline_mode = #tpu.pipeline_mode<synchronous>, transform_indices = @transform_1, window_bounds = array<i64: 32, 40>}, {pipeline_mode = #tpu.pipeline_mode<synchronous>, transform_indices = @transform_2, window_bounds = array<i64: 32, 4>}, {transform_indices = @transform_3, window_bounds = array<i64: 128, 512>}]} {
    %c0 = arith.constant 0 : index
    %c0_0 = arith.constant 0 : index
    %0 = vector.load %arg2[%c0, %c0_0] : memref<32x40xf32, #tpu.memory_space<vmem>>, vector<32x40xf32>
    %c0_1 = arith.constant 0 : index
    %c0_2 = arith.constant 0 : index
    %1 = vector.load %arg1[%c0_1, %c0_2] : memref<40x512xf32, #tpu.memory_space<vmem>>, vector<40x512xf32>
    %cst = arith.constant dense<0.000000e+00> : vector<32x512xf32>
    %2 = tpu.matmul %0, %1, %cst {dimension_numbers = #tpu.dot_dimension_numbers<[1], [0], [0], [1], [0, 0, 1, 1], [], []>} : vector<32x40xf32>, vector<40x512xf32>, vector<32x512xf32> -> vector<32x512xf32>
    %c0_3 = arith.constant 0 : index
    %c0_4 = arith.constant 0 : index
    %3 = vector.load %arg3[%c0_3, %c0_4] : memref<32x4xf32, #tpu.memory_space<vmem>>, vector<32x1xf32>
    %c0_5 = arith.constant 0 : index
    %c2 = arith.constant 2 : index
    %4 = vector.load %arg3[%c0_5, %c2] : memref<32x4xf32, #tpu.memory_space<vmem>>, vector<32x1xf32>
    %cst_6 = arith.constant 1.000000e+00 : f32
    %5 = vector.broadcast %cst_6 : f32 to vector<32x1xf32>
    %6 = arith.subf %5, %3 : vector<32x1xf32>
    %7 = vector.broadcast %6 : vector<32x1xf32> to vector<32x512xf32>
    %8 = arith.mulf %7, %2 : vector<32x512xf32>
    %9 = vector.broadcast %4 : vector<32x1xf32> to vector<32x512xf32>
    %10 = arith.cmpf ogt, %8, %9 : vector<32x512xf32>
    %11 = arith.extui %10 : vector<32x512xi1> to vector<32x512xi32>
    %12 = arith.sitofp %11 : vector<32x512xi32> to vector<32x512xf32>
    %c0_7 = arith.constant 0 : index
    %c0_8 = arith.constant 0 : index
    %13 = vector.load %arg4[%c0_7, %c0_8] : memref<128x512xf32, #tpu.memory_space<vmem>>, vector<32x512xf32>
    tpu.vector_store %arg4[%c0_7, %c0_8], %12 {strides = array<i32>} : memref<128x512xf32, #tpu.memory_space<vmem>>, vector<32x512xf32>,
    %c32 = arith.constant 32 : index
    %c0_9 = arith.constant 0 : index
    %14 = vector.load %arg4[%c32, %c0_9] : memref<128x512xf32, #tpu.memory_space<vmem>>, vector<32x512xf32>
    tpu.vector_store %arg4[%c32, %c0_9], %8 {strides = array<i32>} : memref<128x512xf32, #tpu.memory_space<vmem>>, vector<32x512xf32>,
    %c64 = arith.constant 64 : index
    %c0_10 = arith.constant 0 : index
    %15 = vector.load %arg4[%c64, %c0_10] : memref<128x512xf32, #tpu.memory_space<vmem>>, vector<32x512xf32>
    tpu.vector_store %arg4[%c64, %c0_10], %12 {strides = array<i32>} : memref<128x512xf32, #tpu.memory_space<vmem>>, vector<32x512xf32>,
    %cst_11 = arith.constant 0.000000e+00 : f32
    %16 = vector.broadcast %cst_11 : f32 to vector<32x512xf32>
    %c96 = arith.constant 96 : index
    %c0_12 = arith.constant 0 : index
    %17 = vector.load %arg4[%c96, %c0_12] : memref<128x512xf32, #tpu.memory_space<vmem>>, vector<32x512xf32>
    tpu.vector_store %arg4[%c96, %c0_12], %16 {strides = array<i32>} : memref<128x512xf32, #tpu.memory_space<vmem>>, vector<32x512xf32>,
    return
  }
  func.func @transform_0(%arg0: i32) -> (i32, i32) {
    %c0_i32 = arith.constant 0 : i32
    %c0_i32_0 = arith.constant 0 : i32
    return %c0_i32, %arg0 : i32, i32
  }
  func.func @transform_1(%arg0: i32) -> (i32, i32) {
    %c0_i32 = arith.constant 0 : i32
    %c0_i32_0 = arith.constant 0 : i32
    %c0_i32_1 = arith.constant 0 : i32
    return %c0_i32, %c0_i32_0 : i32, i32
  }
  func.func @transform_2(%arg0: i32) -> (i32, i32) {
    %c0_i32 = arith.constant 0 : i32
    %c0_i32_0 = arith.constant 0 : i32
    %c0_i32_1 = arith.constant 0 : i32
    return %c0_i32, %c0_i32_0 : i32, i32
  }
  func.func @transform_3(%arg0: i32) -> (i32, i32) {
    %c0_i32 = arith.constant 0 : i32
    %c0_i32_0 = arith.constant 0 : i32
    return %c0_i32, %arg0 : i32, i32
  }
}

</mosaic_0001>

<llo_original>
// kernel: tpu_custom_call.1
$region0: #{tpu_custom_call.1}
  #allocation0 [shape = 'u32[]', space=smem, size = 0x4, offset = 0x4, fixed_abs, tag = 'smem constant byte address 0x4 - core index']
  #allocation1 [shape = 'u32[144,128]{1,0:T(1,128)}', space=vmem, size = 0x12000, scoped, tag = 'internal scratch']
  %s0 = inlined_call_operand.hbm [shape: f32[40,512], index: 0, kind: input, shape index: {}]
  %s1 = inlined_call_operand.vmem [shape: f32[32,40], index: 1, kind: input, shape index: {}]
  %s2 = inlined_call_operand.vmem [shape: f32[32,4], index: 2, kind: input, shape index: {}]
  %s3 = inlined_call_operand.hbm [shape: f32[128,512], index: 3, kind: output, shape index: {}]
  %s4 = sld [smem:[#allocation0]]
  $region26: #{tpu_custom_call.1} parent=0
    _
  %s6 = ssub.s32 1, %s4
  %s7 = scalar_select 0, %s6, %s4
  $region1: #{tpu_custom_call.1} parent=0
    #allocation2 [shape = 'u8[81920]{0}', space=vmem, size = 0x14000, scoped, tag = 'input window, operand 0, single buffered']
    #allocation3 [shape = 's32[1]{0}', space=sflag, size = 0x4, scoped, tag = 'scoped memory for tpu_custom_call.1']
    #allocation4 [shape = 's32[1]{0}', space=sflag, size = 0x4, scoped, tag = 'scoped memory for tpu_custom_call.1']
    #allocation5 [shape = 'u8[262144]{0}', space=vmem, size = 0x40000, scoped, tag = 'output window, operand 0, single buffered']
    %8 = vsyncpa [#allocation3], 0
    %9 = vsyncpa [#allocation4], 0
    // Predicated region
    $region2: #{tpu_custom_call.1} parent=1 // pred_check
      _
    $region3: #{tpu_custom_call.1} parent=1 // pred_check_branch
      %11 = sbr.rel (0) target = $region5
    $region4: #{tpu_custom_call.1} parent=1 // pred_region
      %s13 = ssub.s32 2560, 2560
      %14 = vsyncadd [#allocation3], %s13
      %s15 = sshll.u32 [#allocation2], 4
      %s16 = int_to_ptr.vmem [resolvable:$true] %s15
      %21 = dma.hbm_to_vmem [thread:$0]  %s0, 2560, %s16, [#allocation3], 512, 512, 32
    $region5: #{tpu_custom_call.1} parent=1 // pred_fallthru
      _
    // Predicated region
    $region6: #{tpu_custom_call.1} parent=1 // pred_check
      _
    $region7: #{tpu_custom_call.1} parent=1 // pred_check_branch
      %23 = sbr.rel (0) target = $region9
    $region8: #{tpu_custom_call.1} parent=1 // pred_region
      _
    $region9: #{tpu_custom_call.1} parent=1 // pred_fallthru
      _
    // Predicated region
    $region10: #{tpu_custom_call.1} parent=1 // pred_check
      _
    $region11: #{tpu_custom_call.1} parent=1 // pred_check_branch
      %25 = sbr.rel (0) target = $region13
    $region12: #{tpu_custom_call.1} parent=1 // pred_region
      _
    $region13: #{tpu_custom_call.1} parent=1 // pred_fallthru
      _
    // Predicated region
    $region14: #{tpu_custom_call.1} parent=1 // pred_check
      _
    $region15: #{tpu_custom_call.1} parent=1 // pred_check_branch
      %27 = sbr.rel (0) target = $region17
    $region16: #{tpu_custom_call.1} parent=1 // pred_region
      %28 = dma.done [#allocation3], 2560
    $region17: #{tpu_custom_call.1} parent=1 // pred_fallthru
      _
    %v29 = vld [vmem:[%s1] sm:$0xff]
    %v30 = vld [vmem:[%s1 + $0x8] sm:$0xff]
    %v31 = vld [vmem:[%s1 + $0x10] sm:$0xff]
    %v32 = vld [vmem:[%s1 + $0x18] sm:$0xff]
    %v33 = vld [vmem:[#allocation2] sm:$0xff]
    %v34 = vld [vmem:[#allocation2 + $0x8] sm:$0xff]
    %v35 = vld [vmem:[#allocation2 + $0x10] sm:$0xff]
    %v36 = vld [vmem:[#allocation2 + $0x18] sm:$0xff]
    %v37 = vld [vmem:[#allocation2 + $0x20] sm:$0xff]
    %v38 = vld [vmem:[#allocation2 + $0x28] sm:$0xff]
    %v39 = vld [vmem:[#allocation2 + $0x30] sm:$0xff]
    %v40 = vld [vmem:[#allocation2 + $0x38] sm:$0xff]
    %v41 = vld [vmem:[#allocation2 + $0x40] sm:$0xff]
    %v42 = vld [vmem:[#allocation2 + $0x48] sm:$0xff]
    %v43 = vld [vmem:[#allocation2 + $0x50] sm:$0xff]
    %v44 = vld [vmem:[#allocation2 + $0x58] sm:$0xff]
    %v45 = vld [vmem:[#allocation2 + $0x60] sm:$0xff]
    %v46 = vld [vmem:[#allocation2 + $0x68] sm:$0xff]
    %v47 = vld [vmem:[#allocation2 + $0x70] sm:$0xff]
    %v48 = vld [vmem:[#allocation2 + $0x78] sm:$0xff]
    %v49 = vld [vmem:[#allocation2 + $0x80] sm:$0xff]
    %v50 = vld [vmem:[#allocation2 + $0x88] sm:$0xff]
    %v51 = vld [vmem:[#allocation2 + $0x90] sm:$0xff]
    %v52 = vld [vmem:[#allocation2 + $0x98] sm:$0xff]
    %vm53 = vcmask 326656
    %v55 = vsel %vm53, %v29, 0
    %v58 = vsel %vm53, %v30, 0
    %v61 = vsel %vm53, %v31, 0
    %v64 = vsel %vm53, %v32, 0
    %66 = vmatprep.subr.mxu0 %v34
    %67 = vmatpush1.msra.mxu0 %v33
    %68 = vmatprep.subr.mxu0 %v38
    %69 = vmatpush1.msra.mxu0 %v37
    %70 = vmatprep.subr.mxu0 %v42
    %71 = vmatpush1.msra.mxu0 %v41
    %72 = vmatprep.subr.mxu0 %v46
    %73 = vmatpush1.msra.mxu0 %v45
    %74 = vmatprep.subr.mxu0 %v50
    %75 = vmatpush1.msra.mxu0 %v49
    %76 = vmatprep.subr.mxu0 0.0
    %77 = vmatpush1.msra.mxu0 0.0
    %78 = vmatprep.subr.mxu0 0.0
    %79 = vmatpush1.msra.mxu0 0.0
    %80 = vmatprep.subr.mxu0 0.0
    %81 = vmatpush1.msra.mxu0 0.0
    %82 = vmatprep.subr.mxu0 0.0
    %83 = vmatpush1.msra.mxu0 0.0
    %84 = vmatprep.subr.mxu0 0.0
    %85 = vmatpush1.msra.mxu0 0.0
    %86 = vmatprep.subr.mxu0 0.0
    %87 = vmatpush1.msra.mxu0 0.0
    %88 = vmatprep.subr.mxu0 0.0
    %89 = vmatpush1.msra.mxu0 0.0
    %90 = vmatprep.subr.mxu0 0.0
    %91 = vmatpush1.msra.mxu0 0.0
    %92 = vmatprep.subr.mxu0 0.0
    %93 = vmatpush1.msra.mxu0 0.0
    %94 = vmatprep.subr.mxu0 0.0
    %95 = vmatpush1.msra.mxu0 0.0
    %96 = vmatprep.subr.mxu0 0.0
    %97 = vmatpush1.msra.mxu0 0.0
    %98 = vmatprep.subr.mxu0 0.0
    %99 = vmatpush1.msra.mxu0 0.0
    %100 = vmatprep.subr.mxu0 0.0
    %101 = vmatpush1.msra.mxu0 0.0
    %102 = vmatprep.subr.mxu0 0.0
    %103 = vmatpush1.msra.mxu0 0.0
    %104 = vmatprep.subr.mxu0 0.0
    %105 = vmatpush1.msra.mxu0 0.0
    %106 = vmatprep.subr.mxu0 0.0
    %107 = vmatpush1.msra.mxu0 0.0
    %108 = vmatprep.subr.mxu0 0.0
    %109 = vmatpush1.msra.mxu0 0.0
    %110 = vmatprep.subr.mxu0 0.0
    %111 = vmatpush1.msra.mxu0 0.0
    %112 = vmatprep.subr.mxu0 0.0
    %113 = vmatpush1.msra.mxu0 0.0
    %114 = vmatprep.subr.mxu0 0.0
    %115 = vmatpush1.msra.mxu0 0.0
    %116 = vmatprep.subr.mxu0 0.0
    %117 = vmatpush1.msra.mxu0 0.0
    %118 = vmatprep.subr.mxu0 0.0
    %119 = vmatpush1.msra.mxu0 0.0
    %120 = vmatprep.subr.mxu0 0.0
    %121 = vmatpush1.msra.mxu0 0.0
    %122 = vmatprep.subr.mxu0 0.0
    %123 = vmatpush1.msra.mxu0 0.0
    %124 = vmatprep.subr.mxu0 0.0
    %125 = vmatpush1.msra.mxu0 0.0
    %126 = vmatprep.subr.mxu0 0.0
    %127 = vmatpush1.msra.mxu0 0.0
    %128 = vmatprep.subr.mxu0 0.0
    %129 = vmatpush1.msra.mxu0 0.0
    %130 = vmatprep.mubr.f32.mxu0 0.0
    %131 = vmatmul.mubr.f32.gmra.mrb[0].mxu0 %v55
    %v132 = vpop.f32.mrb[0].mxu0
    %v133 = vadd.f32 0.0, %v132
    %v134 = vpop.f32.mrb[0].mxu0
    %v135 = vadd.f32 0.0, %v134
    %136 = vmatprep.mubr.f32.mxu0 0.0
    %137 = vmatmul.mubr.f32.gmra.mrb[0].mxu0 %v58
    %v138 = vpop.f32.mrb[0].mxu0
    %v139 = vadd.f32 0.0, %v138
    %v140 = vpop.f32.mrb[0].mxu0
    %v141 = vadd.f32 0.0, %v140
    %142 = vmatprep.mubr.f32.mxu0 0.0
    %143 = vmatmul.mubr.f32.gmra.mrb[0].mxu0 %v61
    %v144 = vpop.f32.mrb[0].mxu0
    %v145 = vadd.f32 0.0, %v144
    %v146 = vpop.f32.mrb[0].mxu0
    %v147 = vadd.f32 0.0, %v146
    %148 = vmatprep.mubr.f32.mxu0 0.0
    %149 = vmatmul.mubr.f32.gmra.mrb[0].mxu0 %v64
    %v150 = vpop.f32.mrb[0].mxu0
    %v151 = vadd.f32 0.0, %v150
    %v152 = vpop.f32.mrb[0].mxu0
    %v153 = vadd.f32 0.0, %v152
    %154 = vdwg.mxu0
    %155 = vmatprep.subr.mxu0 %v36
    %156 = vmatpush1.msra.mxu0 %v35
    %157 = vmatprep.subr.mxu0 %v40
    %158 = vmatpush1.msra.mxu0 %v39
    %159 = vmatprep.subr.mxu0 %v44
    %160 = vmatpush1.msra.mxu0 %v43
    %161 = vmatprep.subr.mxu0 %v48
    %162 = vmatpush1.msra.mxu0 %v47
    %163 = vmatprep.subr.mxu0 %v52
    %164 = vmatpush1.msra.mxu0 %v51
    %165 = vmatprep.subr.mxu0 0.0
    %166 = vmatpush1.msra.mxu0 0.0
    %167 = vmatprep.subr.mxu0 0.0
    %168 = vmatpush1.msra.mxu0 0.0
    %169 = vmatprep.subr.mxu0 0.0
    %170 = vmatpush1.msra.mxu0 0.0
    %171 = vmatprep.subr.mxu0 0.0
    %172 = vmatpush1.msra.mxu0 0.0
    %173 = vmatprep.subr.mxu0 0.0
    %174 = vmatpush1.msra.mxu0 0.0
    %175 = vmatprep.subr.mxu0 0.0
    %176 = vmatpush1.msra.mxu0 0.0
    %177 = vmatprep.subr.mxu0 0.0
    %178 = vmatpush1.msra.mxu0 0.0
    %179 = vmatprep.subr.mxu0 0.0
    %180 = vmatpush1.msra.mxu0 0.0
    %181 = vmatprep.subr.mxu0 0.0
    %182 = vmatpush1.msra.mxu0 0.0
    %183 = vmatprep.subr.mxu0 0.0
    %184 = vmatpush1.msra.mxu0 0.0
    %185 = vmatprep.subr.mxu0 0.0
    %186 = vmatpush1.msra.mxu0 0.0
    %187 = vmatprep.subr.mxu0 0.0
    %188 = vmatpush1.msra.mxu0 0.0
    %189 = vmatprep.subr.mxu0 0.0
    %190 = vmatpush1.msra.mxu0 0.0
    %191 = vmatprep.subr.mxu0 0.0
    %192 = vmatpush1.msra.mxu0 0.0
    %193 = vmatprep.subr.mxu0 0.0
    %194 = vmatpush1.msra.mxu0 0.0
    %195 = vmatprep.subr.mxu0 0.0
    %196 = vmatpush1.msra.mxu0 0.0
    %197 = vmatprep.subr.mxu0 0.0
    %198 = vmatpush1.msra.mxu0 0.0
    %199 = vmatprep.subr.mxu0 0.0
    %200 = vmatpush1.msra.mxu0 0.0
    %201 = vmatprep.subr.mxu0 0.0
    %202 = vmatpush1.msra.mxu0 0.0
    %203 = vmatprep.subr.mxu0 0.0
    %204 = vmatpush1.msra.mxu0 0.0
    %205 = vmatprep.subr.mxu0 0.0
    %206 = vmatpush1.msra.mxu0 0.0
    %207 = vmatprep.subr.mxu0 0.0
    %208 = vmatpush1.msra.mxu0 0.0
    %209 = vmatprep.subr.mxu0 0.0
    %210 = vmatpush1.msra.mxu0 0.0
    %211 = vmatprep.subr.mxu0 0.0
    %212 = vmatpush1.msra.mxu0 0.0
    %213 = vmatprep.subr.mxu0 0.0
    %214 = vmatpush1.msra.mxu0 0.0
    %215 = vmatprep.subr.mxu0 0.0
    %216 = vmatpush1.msra.mxu0 0.0
    %217 = vmatprep.subr.mxu0 0.0
    %218 = vmatpush1.msra.mxu0 0.0
    %219 = vmatprep.mubr.f32.mxu0 0.0
    %220 = vmatmul.mubr.f32.gmra.mrb[0].mxu0 %v55
    %v221 = vpop.f32.mrb[0].mxu0
    %v222 = vadd.f32 0.0, %v221
    %v223 = vpop.f32.mrb[0].mxu0
    %v224 = vadd.f32 0.0, %v223
    %225 = vmatprep.mubr.f32.mxu0 0.0
    %226 = vmatmul.mubr.f32.gmra.mrb[0].mxu0 %v58
    %v227 = vpop.f32.mrb[0].mxu0
    %v228 = vadd.f32 0.0, %v227
    %v229 = vpop.f32.mrb[0].mxu0
    %v230 = vadd.f32 0.0, %v229
    %231 = vmatprep.mubr.f32.mxu0 0.0
    %232 = vmatmul.mubr.f32.gmra.mrb[0].mxu0 %v61
    %v233 = vpop.f32.mrb[0].mxu0
    %v234 = vadd.f32 0.0, %v233
    %v235 = vpop.f32.mrb[0].mxu0
    %v236 = vadd.f32 0.0, %v235
    %237 = vmatprep.mubr.f32.mxu0 0.0
    %238 = vmatmul.mubr.f32.gmra.mrb[0].mxu0 %v64
    %v239 = vpop.f32.mrb[0].mxu0
    %v240 = vadd.f32 0.0, %v239
    %v241 = vpop.f32.mrb[0].mxu0
    %v242 = vadd.f32 0.0, %v241
    %243 = vdwg.mxu0
    %v244 = vld [vmem:[%s2] sm:$0xff]
    %v245 = vld [vmem:[%s2 + $0x8] sm:$0xff]
    %v246 = vld [vmem:[%s2 + $0x10] sm:$0xff]
    %v247 = vld [vmem:[%s2 + $0x18] sm:$0xff]
    %v248 = vsub.f32 1.0, %v244
    %v249 = vsub.f32 1.0, %v245
    %v250 = vsub.f32 1.0, %v246
    %v251 = vsub.f32 1.0, %v247
    %253 = vset.pattern.permute.xlu0 0
    %254 = vperm.xlu0 %253, %v248
    %v255 = vpop.permute.xlu0 %254
    %258 = vset.pattern.permute.xlu0 0
    %259 = vperm.xlu0 %258, %v249
    %v260 = vpop.permute.xlu0 %259
    %263 = vset.pattern.permute.xlu0 0
    %264 = vperm.xlu0 %263, %v250
    %v265 = vpop.permute.xlu0 %264
    %268 = vset.pattern.permute.xlu0 0
    %269 = vperm.xlu0 %268, %v251
    %v270 = vpop.permute.xlu0 %269
    %v272 = vmul.f32 %v255, %v133
    %v273 = vmul.f32 %v255, %v135
    %v274 = vmul.f32 %v255, %v222
    %v275 = vmul.f32 %v255, %v224
    %v276 = vmul.f32 %v260, %v139
    %v277 = vmul.f32 %v260, %v141
    %v278 = vmul.f32 %v260, %v228
    %v279 = vmul.f32 %v260, %v230
    %v280 = vmul.f32 %v265, %v145
    %v281 = vmul.f32 %v265, %v147
    %v282 = vmul.f32 %v265, %v234
    %v283 = vmul.f32 %v265, %v236
    %v284 = vmul.f32 %v270, %v151
    %v285 = vmul.f32 %v270, %v153
    %v286 = vmul.f32 %v270, %v240
    %v287 = vmul.f32 %v270, %v242
    %289 = vset.pattern.permute.xlu0 2
    %290 = vperm.xlu0 %289, %v244
    %v291 = vpop.permute.xlu0 %290
    %294 = vset.pattern.permute.xlu0 2
    %295 = vperm.xlu0 %294, %v245
    %v296 = vpop.permute.xlu0 %295
    %299 = vset.pattern.permute.xlu0 2
    %300 = vperm.xlu0 %299, %v246
    %v301 = vpop.permute.xlu0 %300
    %304 = vset.pattern.permute.xlu0 2
    %305 = vperm.xlu0 %304, %v247
    %v306 = vpop.permute.xlu0 %305
    %vm308 = vcmp.gt.f32.partialorder %v272, %v291
    %vm309 = vcmp.gt.f32.partialorder %v273, %v291
    %vm310 = vcmp.gt.f32.partialorder %v274, %v291
    %vm311 = vcmp.gt.f32.partialorder %v275, %v291
    %vm312 = vcmp.gt.f32.partialorder %v276, %v296
    %vm313 = vcmp.gt.f32.partialorder %v277, %v296
    %vm314 = vcmp.gt.f32.partialorder %v278, %v296
    %vm315 = vcmp.gt.f32.partialorder %v279, %v296
    %vm316 = vcmp.gt.f32.partialorder %v280, %v301
    %vm317 = vcmp.gt.f32.partialorder %v281, %v301
    %vm318 = vcmp.gt.f32.partialorder %v282, %v301
    %vm319 = vcmp.gt.f32.partialorder %v283, %v301
    %vm320 = vcmp.gt.f32.partialorder %v284, %v306
    %vm321 = vcmp.gt.f32.partialorder %v285, %v306
    %vm322 = vcmp.gt.f32.partialorder %v286, %v306
    %vm323 = vcmp.gt.f32.partialorder %v287, %v306
    %v324 = vsel %vm308, 1, 0
    %v325 = vsel %vm309, 1, 0
    %v326 = vsel %vm310, 1, 0
    %v327 = vsel %vm311, 1, 0
    %v328 = vsel %vm312, 1, 0
    %v329 = vsel %vm313, 1, 0
    %v330 = vsel %vm314, 1, 0
    %v331 = vsel %vm315, 1, 0
    %v332 = vsel %vm316, 1, 0
    %v333 = vsel %vm317, 1, 0
    %v334 = vsel %vm318, 1, 0
    %v335 = vsel %vm319, 1, 0
    %v336 = vsel %vm320, 1, 0
    %v337 = vsel %vm321, 1, 0
    %v338 = vsel %vm322, 1, 0
    %v339 = vsel %vm323, 1, 0
    %v340 = vcvt.s32.f32 %v324
    %v341 = vcvt.s32.f32 %v325
    %v342 = vcvt.s32.f32 %v326
    %v343 = vcvt.s32.f32 %v327
    %v344 = vcvt.s32.f32 %v328
    %v345 = vcvt.s32.f32 %v329
    %v346 = vcvt.s32.f32 %v330
    %v347 = vcvt.s32.f32 %v331
    %v348 = vcvt.s32.f32 %v332
    %v349 = vcvt.s32.f32 %v333
    %v350 = vcvt.s32.f32 %v334
    %v351 = vcvt.s32.f32 %v335
    %v352 = vcvt.s32.f32 %v336
    %v353 = vcvt.s32.f32 %v337
    %v354 = vcvt.s32.f32 %v338
    %v355 = vcvt.s32.f32 %v339
    %356 = vst [vmem:[#allocation5] sm:$0xff] %v340
    %357 = vst [vmem:[#allocation5 + $0x8] sm:$0xff] %v341
    %358 = vst [vmem:[#allocation5 + $0x10] sm:$0xff] %v342
    %359 = vst [vmem:[#allocation5 + $0x18] sm:$0xff] %v343
    %360 = vst [vmem:[#allocation5 + $0x20] sm:$0xff] %v344
    %361 = vst [vmem:[#allocation5 + $0x28] sm:$0xff] %v345
    %362 = vst [vmem:[#allocation5 + $0x30] sm:$0xff] %v346
    %363 = vst [vmem:[#allocation5 + $0x38] sm:$0xff] %v347
    %364 = vst [vmem:[#allocation5 + $0x40] sm:$0xff] %v348
    %365 = vst [vmem:[#allocation5 + $0x48] sm:$0xff] %v349
    %366 = vst [vmem:[#allocation5 + $0x50] sm:$0xff] %v350
    %367 = vst [vmem:[#allocation5 + $0x58] sm:$0xff] %v351
    %368 = vst [vmem:[#allocation5 + $0x60] sm:$0xff] %v352
    %369 = vst [vmem:[#allocation5 + $0x68] sm:$0xff] %v353
    %370 = vst [vmem:[#allocation5 + $0x70] sm:$0xff] %v354
    %371 = vst [vmem:[#allocation5 + $0x78] sm:$0xff] %v355
    %372 = vst [vmem:[#allocation5 + $0x80] sm:$0xff] %v272
    %373 = vst [vmem:[#allocation5 + $0x88] sm:$0xff] %v273
    %374 = vst [vmem:[#allocation5 + $0x90] sm:$0xff] %v274
    %375 = vst [vmem:[#allocation5 + $0x98] sm:$0xff] %v275
    %376 = vst [vmem:[#allocation5 + $0xa0] sm:$0xff] %v276
    %377 = vst [vmem:[#allocation5 + $0xa8] sm:$0xff] %v277
    %378 = vst [vmem:[#allocation5 + $0xb0] sm:$0xff] %v278
    %379 = vst [vmem:[#allocation5 + $0xb8] sm:$0xff] %v279
    %380 = vst [vmem:[#allocation5 + $0xc0] sm:$0xff] %v280
    %381 = vst [vmem:[#allocation5 + $0xc8] sm:$0xff] %v281
    %382 = vst [vmem:[#allocation5 + $0xd0] sm:$0xff] %v282
    %383 = vst [vmem:[#allocation5 + $0xd8] sm:$0xff] %v283
    %384 = vst [vmem:[#allocation5 + $0xe0] sm:$0xff] %v284
    %385 = vst [vmem:[#allocation5 + $0xe8] sm:$0xff] %v285
    %386 = vst [vmem:[#allocation5 + $0xf0] sm:$0xff] %v286
    %387 = vst [vmem:[#allocation5 + $0xf8] sm:$0xff] %v287
    %388 = vst [vmem:[#allocation5 + $0x100] sm:$0xff] %v340
    %389 = vst [vmem:[#allocation5 + $0x108] sm:$0xff] %v341
    %390 = vst [vmem:[#allocation5 + $0x110] sm:$0xff] %v342
    %391 = vst [vmem:[#allocation5 + $0x118] sm:$0xff] %v343
    %392 = vst [vmem:[#allocation5 + $0x120] sm:$0xff] %v344
    %393 = vst [vmem:[#allocation5 + $0x128] sm:$0xff] %v345
    %394 = vst [vmem:[#allocation5 + $0x130] sm:$0xff] %v346
    %395 = vst [vmem:[#allocation5 + $0x138] sm:$0xff] %v347
    %396 = vst [vmem:[#allocation5 + $0x140] sm:$0xff] %v348
    %397 = vst [vmem:[#allocation5 + $0x148] sm:$0xff] %v349
    %398 = vst [vmem:[#allocation5 + $0x150] sm:$0xff] %v350
    %399 = vst [vmem:[#allocation5 + $0x158] sm:$0xff] %v351
    %400 = vst [vmem:[#allocation5 + $0x160] sm:$0xff] %v352
    %401 = vst [vmem:[#allocation5 + $0x168] sm:$0xff] %v353
    %402 = vst [vmem:[#allocation5 + $0x170] sm:$0xff] %v354
    %403 = vst [vmem:[#allocation5 + $0x178] sm:$0xff] %v355
    %404 = vst [vmem:[#allocation5 + $0x180] sm:$0xff] 0.0
    %405 = vst [vmem:[#allocation5 + $0x188] sm:$0xff] 0.0
    %406 = vst [vmem:[#allocation5 + $0x190] sm:$0xff] 0.0
    %407 = vst [vmem:[#allocation5 + $0x198] sm:$0xff] 0.0
    %408 = vst [vmem:[#allocation5 + $0x1a0] sm:$0xff] 0.0
    %409 = vst [vmem:[#allocation5 + $0x1a8] sm:$0xff] 0.0
    %410 = vst [vmem:[#allocation5 + $0x1b0] sm:$0xff] 0.0
    %411 = vst [vmem:[#allocation5 + $0x1b8] sm:$0xff] 0.0
    %412 = vst [vmem:[#allocation5 + $0x1c0] sm:$0xff] 0.0
    %413 = vst [vmem:[#allocation5 + $0x1c8] sm:$0xff] 0.0
    %414 = vst [vmem:[#allocation5 + $0x1d0] sm:$0xff] 0.0
    %415 = vst [vmem:[#allocation5 + $0x1d8] sm:$0xff] 0.0
    %416 = vst [vmem:[#allocation5 + $0x1e0] sm:$0xff] 0.0
    %417 = vst [vmem:[#allocation5 + $0x1e8] sm:$0xff] 0.0
    %418 = vst [vmem:[#allocation5 + $0x1f0] sm:$0xff] 0.0
    %419 = vst [vmem:[#allocation5 + $0x1f8] sm:$0xff] 0.0
    // Predicated region
    $region18: #{tpu_custom_call.1} parent=1 // pred_check
      _
    $region19: #{tpu_custom_call.1} parent=1 // pred_check_branch
      %421 = sbr.rel (0) target = $region21
    $region20: #{tpu_custom_call.1} parent=1 // pred_region
      %s423 = ssub.s32 8192, 8192
      %424 = vsyncadd [#allocation4], %s423
      %s425 = sshll.u32 [#allocation5], 4
      %s426 = int_to_ptr.vmem [resolvable:$true] %s425
      %431 = dma.vmem_to_hbm [thread:$0]  %s426, 8192, %s3, [#allocation4], 512, 512, 32
    $region21: #{tpu_custom_call.1} parent=1 // pred_fallthru
      _
    // Predicated region
    $region22: #{tpu_custom_call.1} parent=1 // pred_check
      _
    $region23: #{tpu_custom_call.1} parent=1 // pred_check_branch
      %433 = sbr.rel (0) target = $region25
    $region24: #{tpu_custom_call.1} parent=1 // pred_region
      %434 = dma.done [#allocation4], 8192
    $region25: #{tpu_custom_call.1} parent=1 // pred_fallthru
      _
    %435 = vsyncpa [#allocation3], 1
    %436 = vsyncpa [#allocation4], 1

</llo_original>
